<compile_context>
chip_gen: v6e
topology: v6e:2x2x1
jax: 0.10.0
libtpu: 0.0.40
codegen_flags: <defaults>
</compile_context>

<pallas_src>
import functools
import numpy as np
import jax
import jax.numpy as jnp
from jax.experimental import pallas as pl
from jax.experimental.pallas import tpu as pltpu


def _round_up(n, m):
    return (n + m - 1) // m * m


def _embed_kernel(x_ref, s_cont_ref, e_all_ref, out_ref, *,
                  cat_idxs, row_offsets):
    x = x_ref[...]                                      # (TB, input_dim) f32

    # continuous columns routed to their output positions (single MXU matmul)
    out = jnp.dot(x, s_cont_ref[...],
                  preferred_element_type=jnp.float32,
                  precision=jax.lax.Precision.HIGHEST)

    # combined one-hot over all packed categorical tables
    tb = x.shape[0]
    total_cat_pad = e_all_ref.shape[0]
    iota = jax.lax.broadcasted_iota(jnp.int32, (tb, total_cat_pad), 1)
    onehot = jnp.zeros((tb, total_cat_pad), jnp.float32)
    for ci, ro in zip(cat_idxs, row_offsets):           # small static unroll
        code = x[:, ci:ci + 1].astype(jnp.int32) + ro   # (TB, 1), ".long()"
        onehot = onehot + (iota == code).astype(jnp.float32)

    # embedding lookup as one-hot matmul against the packed tables (MXU)
    out = out + jnp.dot(onehot, e_all_ref[...],
                        preferred_element_type=jnp.float32,
                        precision=jax.lax.Precision.HIGHEST)
    out_ref[...] = out


def embedding_generator(x, emb_tables, *, cat_idxs, cat_dims, cat_emb_dims,
                        block_rows=256):
    """Pallas implementation of EmbeddingGenerator.forward."""
    B, input_dim = x.shape
    if len(cat_idxs) == 0:                 # skip_embedding path
        return x

    n_cat = len(cat_idxs)
    post_embed_dim = int(input_dim + int(np.sum(cat_emb_dims)) - n_cat)

    # output column offset for every input feature (concat order)
    cat_pos = {int(ci): j for j, ci in enumerate(cat_idxs)}
    post_off = []
    p = 0
    for i in range(input_dim):
        post_off.append(p)
        p += cat_emb_dims[cat_pos[i]] if i in cat_pos else 1
    assert p == post_embed_dim

    P_pad = _round_up(post_embed_dim, 128)          # lane-dense output slab
    total_cat = int(np.sum(cat_dims))
    total_cat_pad = _round_up(total_cat, 8)

    # 0/1 scatter matrix for continuous passthrough: out += x @ s_cont
    s_cont = np.zeros((input_dim, P_pad), np.float32)
    for i in range(input_dim):
        if i not in cat_pos:
            s_cont[i, post_off[i]] = 1.0

    # all embedding tables packed block-wise into one matrix
    e_all = np.zeros((total_cat_pad, P_pad), np.float32)
    row_off = []
    r = 0
    for j, ci in enumerate(cat_idxs):
        row_off.append(r)
        e_all[r:r + cat_dims[j],
              post_off[ci]:post_off[ci] + cat_emb_dims[j]] = \
            np.asarray(emb_tables[j], np.float32)
        r += cat_dims[j]

    # batch tiling: many rows per grid step, sublane-aligned
    B_pad = _round_up(B, 8)
    tb = B_pad if B_pad <= block_rows else block_rows
    B_pad = _round_up(B_pad, tb)
    if B_pad != B:
        x = jnp.pad(x, ((0, B_pad - B), (0, 0)))

    kernel = functools.partial(_embed_kernel,
                               cat_idxs=tuple(int(c) for c in cat_idxs),
                               row_offsets=tuple(row_off))

    out = pl.pallas_call(
        kernel,
        out_shape=jax.ShapeDtypeStruct((B_pad, P_pad), jnp.float32),
        grid_spec=pltpu.PrefetchScalarGridSpec(
            num_scalar_prefetch=0,
            grid=(B_pad // tb,),
            in_specs=[
                pl.BlockSpec((tb, input_dim), lambda i: (i, 0)),
                pl.BlockSpec((input_dim, P_pad), lambda i: (0, 0)),
                pl.BlockSpec((total_cat_pad, P_pad), lambda i: (0, 0)),
            ],
            out_specs=pl.BlockSpec((tb, P_pad), lambda i: (i, 0)),
        ),
        compiler_params=pltpu.CompilerParams(
            dimension_semantics=("parallel",)),
    )(x, jnp.asarray(s_cont), jnp.asarray(e_all))

    return out[:B, :post_embed_dim]


# ---------------------------- pure-JAX reference ----------------------------
def _reference(x, emb_tables, cat_idxs, input_dim):
    cols = []
    c = 0
    for i in range(input_dim):
        if i in cat_idxs:
            codes = x[:, i].astype(jnp.int32)
            cols.append(jnp.take(emb_tables[c], codes, axis=0))
            c += 1
        else:
            cols.append(x[:, i:i + 1])
    return jnp.concatenate(cols, axis=1)


if __name__ == "__main__":
    # Small, deterministic config
    input_dim = 12
    cat_idxs = [1, 4, 9]
    cat_dims = [5, 7, 11]
    cat_emb_dims = [3, 4, 2]
    B = 32
    # post_embed_dim = 12 + (3+4+2) - 3 = 18

    key = jax.random.PRNGKey(0)
    keys = jax.random.split(key, 2 + len(cat_dims))
    k_cont, k_cat, k_emb = keys[0], keys[1], keys[2:]

    # input: continuous columns are floats, categorical columns hold integer
    # category codes stored as floats (as in the PyTorch usage)
    x = jax.random.normal(k_cont, (B, input_dim), jnp.float32)
    code_keys = jax.random.split(k_cat, len(cat_idxs))
    for j, (ci, cd) in enumerate(zip(cat_idxs, cat_dims)):
        codes = jax.random.randint(code_keys[j], (B,), 0, cd)
        x = x.at[:, ci].set(codes.astype(jnp.float32))

    # embedding tables (nn.Embedding default init ~ N(0, 1))
    emb_tables = [
        jax.random.normal(k_emb[j], (cat_dims[j], cat_emb_dims[j]),
                          jnp.float32)
        for j in range(len(cat_dims))
    ]

    out = embedding_generator(x, emb_tables, cat_idxs=cat_idxs,
                              cat_dims=cat_dims, cat_emb_dims=cat_emb_dims)
    out = jax.block_until_ready(out)

    ref = _reference(x, emb_tables, cat_idxs, input_dim)
    np.testing.assert_allclose(np.asarray(out), np.asarray(ref),
                               rtol=1e-5, atol=1e-5)
    print("KERNEL_OK")
</pallas_src>

<mosaic_0001>
module attributes {stable_mosaic.version = 11 : i64} {
  func.func @_embed_kernel(%arg0: i32, %arg1: memref<32x12xf32, #tpu.memory_space<vmem>>, %arg2: memref<12x128xf32, #tpu.memory_space<vmem>>, %arg3: memref<24x128xf32, #tpu.memory_space<vmem>>, %arg4: memref<32x128xf32, #tpu.memory_space<vmem>>) attributes {dimension_semantics = [#tpu.dimension_semantics<parallel>], iteration_bounds = array<i64: 1>, scalar_prefetch = 0 : i64, scratch_operands = 0 : i64, tpu.core_type = #tpu.core_type<tc>, window_params = [{transform_indices = @transform_0, window_bounds = array<i64: 32, 12>}, {pipeline_mode = #tpu.pipeline_mode<synchronous>, transform_indices = @transform_1, window_bounds = array<i64: 12, 128>}, {pipeline_mode = #tpu.pipeline_mode<synchronous>, transform_indices = @transform_2, window_bounds = array<i64: 24, 128>}, {transform_indices = @transform_3, window_bounds = array<i64: 32, 128>}]} {
    %c0 = arith.constant 0 : index
    %c0_0 = arith.constant 0 : index
    %0 = vector.load %arg1[%c0, %c0_0] : memref<32x12xf32, #tpu.memory_space<vmem>>, vector<32x12xf32>
    %c0_1 = arith.constant 0 : index
    %c0_2 = arith.constant 0 : index
    %1 = vector.load %arg2[%c0_1, %c0_2] : memref<12x128xf32, #tpu.memory_space<vmem>>, vector<12x128xf32>
    %cst = arith.constant dense<0.000000e+00> : vector<32x128xf32>
    %2 = tpu.matmul %0, %1, %cst {dimension_numbers = #tpu.dot_dimension_numbers<[1], [0], [0], [1], [0, 0, 1, 1], [], []>, precision = #tpu.contract_precision<fp32>} : vector<32x12xf32>, vector<12x128xf32>, vector<32x128xf32> -> vector<32x128xf32>
    %3 = tpu.iota {dimensions = array<i32: 1>} : vector<32x24xi32>
    %cst_3 = arith.constant 0.000000e+00 : f32
    %4 = vector.broadcast %cst_3 : f32 to vector<32x24xf32>
    %5 = vector.extract_strided_slice %0 {offsets = [0, 1], sizes = [32, 1], strides = [1, 1]} : vector<32x12xf32> to vector<32x1xf32>
    %6 = arith.fptosi %5 : vector<32x1xf32> to vector<32x1xi32>
    %c0_i32 = arith.constant 0 : i32
    %7 = vector.broadcast %c0_i32 : i32 to vector<32x1xi32>
    %8 = arith.addi %6, %7 : vector<32x1xi32>
    %9 = vector.broadcast %8 : vector<32x1xi32> to vector<32x24xi32>
    %10 = arith.cmpi eq, %3, %9 : vector<32x24xi32>
    %11 = arith.extui %10 : vector<32x24xi1> to vector<32x24xi32>
    %12 = arith.sitofp %11 : vector<32x24xi32> to vector<32x24xf32>
    %13 = arith.addf %4, %12 : vector<32x24xf32>
    %14 = vector.extract_strided_slice %0 {offsets = [0, 4], sizes = [32, 1], strides = [1, 1]} : vector<32x12xf32> to vector<32x1xf32>
    %15 = arith.fptosi %14 : vector<32x1xf32> to vector<32x1xi32>
    %c5_i32 = arith.constant 5 : i32
    %16 = vector.broadcast %c5_i32 : i32 to vector<32x1xi32>
    %17 = arith.addi %15, %16 : vector<32x1xi32>
    %18 = vector.broadcast %17 : vector<32x1xi32> to vector<32x24xi32>
    %19 = arith.cmpi eq, %3, %18 : vector<32x24xi32>
    %20 = arith.extui %19 : vector<32x24xi1> to vector<32x24xi32>
    %21 = arith.sitofp %20 : vector<32x24xi32> to vector<32x24xf32>
    %22 = arith.addf %13, %21 : vector<32x24xf32>
    %23 = vector.extract_strided_slice %0 {offsets = [0, 9], sizes = [32, 1], strides = [1, 1]} : vector<32x12xf32> to vector<32x1xf32>
    %24 = arith.fptosi %23 : vector<32x1xf32> to vector<32x1xi32>
    %c12_i32 = arith.constant 12 : i32
    %25 = vector.broadcast %c12_i32 : i32 to vector<32x1xi32>
    %26 = arith.addi %24, %25 : vector<32x1xi32>
    %27 = vector.broadcast %26 : vector<32x1xi32> to vector<32x24xi32>
    %28 = arith.cmpi eq, %3, %27 : vector<32x24xi32>
    %29 = arith.extui %28 : vector<32x24xi1> to vector<32x24xi32>
    %30 = arith.sitofp %29 : vector<32x24xi32> to vector<32x24xf32>
    %31 = arith.addf %22, %30 : vector<32x24xf32>
    %c0_4 = arith.constant 0 : index
    %c0_5 = arith.constant 0 : index
    %32 = vector.load %arg3[%c0_4, %c0_5] : memref<24x128xf32, #tpu.memory_space<vmem>>, vector<24x128xf32>
    %cst_6 = arith.constant dense<0.000000e+00> : vector<32x128xf32>
    %33 = tpu.matmul %31, %32, %cst_6 {dimension_numbers = #tpu.dot_dimension_numbers<[1], [0], [0], [1], [0, 0, 1, 1], [], []>, precision = #tpu.contract_precision<fp32>} : vector<32x24xf32>, vector<24x128xf32>, vector<32x128xf32> -> vector<32x128xf32>
    %34 = arith.addf %2, %33 : vector<32x128xf32>
    %c0_7 = arith.constant 0 : index
    %c0_8 = arith.constant 0 : index
    %35 = vector.load %arg4[%c0_7, %c0_8] : memref<32x128xf32, #tpu.memory_space<vmem>>, vector<32x128xf32>
    tpu.vector_store %arg4[%c0_7, %c0_8], %34 {strides = array<i32>} : memref<32x128xf32, #tpu.memory_space<vmem>>, vector<32x128xf32>,
    return
  }
  func.func @transform_0(%arg0: i32) -> (i32, i32) {
    %c0_i32 = arith.constant 0 : i32
    %c0_i32_0 = arith.constant 0 : i32
    return %arg0, %c0_i32 : i32, i32
  }
  func.func @transform_1(%arg0: i32) -> (i32, i32) {
    %c0_i32 = arith.constant 0 : i32
    %c0_i32_0 = arith.constant 0 : i32
    %c0_i32_1 = arith.constant 0 : i32
    return %c0_i32, %c0_i32_0 : i32, i32
  }
  func.func @transform_2(%arg0: i32) -> (i32, i32) {
    %c0_i32 = arith.constant 0 : i32
    %c0_i32_0 = arith.constant 0 : i32
    %c0_i32_1 = arith.constant 0 : i32
    return %c0_i32, %c0_i32_0 : i32, i32
  }
  func.func @transform_3(%arg0: i32) -> (i32, i32) {
    %c0_i32 = arith.constant 0 : i32
    %c0_i32_0 = arith.constant 0 : i32
    return %arg0, %c0_i32 : i32, i32
  }
}

</mosaic_0001>

<llo_original>
// kernel: tpu_custom_call.1
$region0: #{tpu_custom_call.1}
  #allocation0 [shape = 'u32[]', space=smem, size = 0x4, offset = 0x4, fixed_abs, tag = 'smem constant byte address 0x4 - core index']
  #allocation1 [shape = 'u32[144,128]{1,0:T(1,128)}', space=vmem, size = 0x12000, scoped, tag = 'internal scratch']
  %s0 = inlined_call_operand.vmem [shape: f32[32,12], index: 0, kind: input, shape index: {}]
  %s1 = inlined_call_operand.vmem [shape: f32[12,128], index: 1, kind: input, shape index: {}]
  %s2 = inlined_call_operand.vmem [shape: f32[24,128], index: 2, kind: input, shape index: {}]
  %s3 = inlined_call_operand.hbm [shape: f32[32,128], index: 3, kind: output, shape index: {}]
  %s4 = sld [smem:[#allocation0]]
  $region22: #{tpu_custom_call.1} parent=0
    _
  %s6 = ssub.s32 1, %s4
  %s7 = scalar_select 0, %s6, %s4
  $region1: #{tpu_custom_call.1} parent=0
    #allocation2 [shape = 'u8[16384]{0}', space=vmem, size = 0x4000, scoped, tag = 'output window, operand 0, single buffered']
    #allocation3 [shape = 's32[1]{0}', space=sflag, size = 0x4, scoped, tag = 'scoped memory for tpu_custom_call.1']
    %8 = vsyncpa [#allocation3], 0
    // Predicated region
    $region2: #{tpu_custom_call.1} parent=1 // pred_check
      _
    $region3: #{tpu_custom_call.1} parent=1 // pred_check_branch
      %10 = sbr.rel (0) target = $region5
    $region4: #{tpu_custom_call.1} parent=1 // pred_region
      _
    $region5: #{tpu_custom_call.1} parent=1 // pred_fallthru
      _
    // Predicated region
    $region6: #{tpu_custom_call.1} parent=1 // pred_check
      _
    $region7: #{tpu_custom_call.1} parent=1 // pred_check_branch
      %12 = sbr.rel (0) target = $region9
    $region8: #{tpu_custom_call.1} parent=1 // pred_region
      _
    $region9: #{tpu_custom_call.1} parent=1 // pred_fallthru
      _
    // Predicated region
    $region10: #{tpu_custom_call.1} parent=1 // pred_check
      _
    $region11: #{tpu_custom_call.1} parent=1 // pred_check_branch
      %14 = sbr.rel (0) target = $region13
    $region12: #{tpu_custom_call.1} parent=1 // pred_region
      _
    $region13: #{tpu_custom_call.1} parent=1 // pred_fallthru
      _
    %v15 = vld [vmem:[%s0] sm:$0xff]
    %v16 = vld [vmem:[%s0 + $0x8] sm:$0xff]
    %v17 = vld [vmem:[%s0 + $0x10] sm:$0xff]
    %v18 = vld [vmem:[%s0 + $0x18] sm:$0xff]
    %v19 = vld [vmem:[%s1] sm:$0xff]
    %v20 = vld [vmem:[%s1 + $0x8] sm:$0xf]
    %v21 = vlaneseq
    %v22 = vand.u32 %v21, 127
    %v23 = vcvt.f32.s32.to.zero.pseudo %v15
    %v24 = vcvt.f32.s32.to.zero.pseudo %v16
    %v25 = vcvt.f32.s32.to.zero.pseudo %v17
    %v26 = vcvt.f32.s32.to.zero.pseudo %v18
    %27 = vset.pattern.permute.xlu0 1
    %28 = vperm.xlu0 %27, %v23
    %v29 = vpop.permute.xlu0 %28
    %30 = vset.pattern.permute.xlu0 1
    %31 = vperm.xlu0 %30, %v24
    %v32 = vpop.permute.xlu0 %31
    %33 = vset.pattern.permute.xlu0 1
    %34 = vperm.xlu0 %33, %v25
    %v35 = vpop.permute.xlu0 %34
    %36 = vset.pattern.permute.xlu0 1
    %37 = vperm.xlu0 %36, %v26
    %v38 = vpop.permute.xlu0 %37
    %vm39 = vcmp.eq.s32.totalorder %v22, %v29
    %vm40 = vcmp.eq.s32.totalorder %v22, %v32
    %vm41 = vcmp.eq.s32.totalorder %v22, %v35
    %vm42 = vcmp.eq.s32.totalorder %v22, %v38
    %v43 = vsel %vm39, 1, 0
    %v44 = vsel %vm40, 1, 0
    %v45 = vsel %vm41, 1, 0
    %v46 = vsel %vm42, 1, 0
    %v47 = vcvt.s32.f32 %v43
    %v48 = vcvt.s32.f32 %v44
    %v49 = vcvt.s32.f32 %v45
    %v50 = vcvt.s32.f32 %v46
    %v51 = vadd.f32 %v47, 0.0
    %v52 = vadd.f32 %v48, 0.0
    %v53 = vadd.f32 %v49, 0.0
    %v54 = vadd.f32 %v50, 0.0
    %v55 = vadd.s32 %v23, 5
    %v56 = vadd.s32 %v24, 5
    %v57 = vadd.s32 %v25, 5
    %v58 = vadd.s32 %v26, 5
    %59 = vset.pattern.permute.xlu0 4
    %60 = vperm.xlu0 %59, %v55
    %v61 = vpop.permute.xlu0 %60
    %62 = vset.pattern.permute.xlu0 4
    %63 = vperm.xlu0 %62, %v56
    %v64 = vpop.permute.xlu0 %63
    %65 = vset.pattern.permute.xlu0 4
    %66 = vperm.xlu0 %65, %v57
    %v67 = vpop.permute.xlu0 %66
    %68 = vset.pattern.permute.xlu0 4
    %69 = vperm.xlu0 %68, %v58
    %v70 = vpop.permute.xlu0 %69
    %vm71 = vcmp.eq.s32.totalorder %v22, %v61
    %vm72 = vcmp.eq.s32.totalorder %v22, %v64
    %vm73 = vcmp.eq.s32.totalorder %v22, %v67
    %vm74 = vcmp.eq.s32.totalorder %v22, %v70
    %v75 = vsel %vm71, 1, 0
    %v76 = vsel %vm72, 1, 0
    %v77 = vsel %vm73, 1, 0
    %v78 = vsel %vm74, 1, 0
    %v79 = vcvt.s32.f32 %v75
    %v80 = vcvt.s32.f32 %v76
    %v81 = vcvt.s32.f32 %v77
    %v82 = vcvt.s32.f32 %v78
    %v83 = vadd.f32 %v51, %v79
    %v84 = vadd.f32 %v52, %v80
    %v85 = vadd.f32 %v53, %v81
    %v86 = vadd.f32 %v54, %v82
    %v87 = vadd.s32 %v23, 12
    %v88 = vadd.s32 %v24, 12
    %v89 = vadd.s32 %v25, 12
    %v90 = vadd.s32 %v26, 12
    %91 = vset.pattern.permute.xlu0 9
    %92 = vperm.xlu0 %91, %v87
    %v93 = vpop.permute.xlu0 %92
    %94 = vset.pattern.permute.xlu0 9
    %95 = vperm.xlu0 %94, %v88
    %v96 = vpop.permute.xlu0 %95
    %97 = vset.pattern.permute.xlu0 9
    %98 = vperm.xlu0 %97, %v89
    %v99 = vpop.permute.xlu0 %98
    %100 = vset.pattern.permute.xlu0 9
    %101 = vperm.xlu0 %100, %v90
    %v102 = vpop.permute.xlu0 %101
    %vm103 = vcmp.eq.s32.totalorder %v22, %v93
    %vm104 = vcmp.eq.s32.totalorder %v22, %v96
    %vm105 = vcmp.eq.s32.totalorder %v22, %v99
    %vm106 = vcmp.eq.s32.totalorder %v22, %v102
    %v107 = vsel %vm103, 1, 0
    %v108 = vsel %vm104, 1, 0
    %v109 = vsel %vm105, 1, 0
    %v110 = vsel %vm106, 1, 0
    %v111 = vcvt.s32.f32 %v107
    %v112 = vcvt.s32.f32 %v108
    %v113 = vcvt.s32.f32 %v109
    %v114 = vcvt.s32.f32 %v110
    %v115 = vadd.f32 %v83, %v111
    %v116 = vadd.f32 %v84, %v112
    %v117 = vadd.f32 %v85, %v113
    %v118 = vadd.f32 %v86, %v114
    %v119 = vld [vmem:[%s2] sm:$0xff]
    %v120 = vld [vmem:[%s2 + $0x8] sm:$0xff]
    %v121 = vld [vmem:[%s2 + $0x10] sm:$0xff]
    %vm122 = vcmask 195584
    %v124 = vsel %vm122, %v115, 0
    %v127 = vsel %vm122, %v116, 0
    %v130 = vsel %vm122, %v117, 0
    %v133 = vsel %vm122, %v118, 0
    %135 = vmatprep.subr.mxu0 0.0
    %136 = vmatpush1.msra.mxu0 0.0
    %137 = vmatprep.subr.mxu0 0.0
    %138 = vmatpush1.msra.mxu0 0.0
    %139 = vmatprep.subr.mxu0 0.0
    %140 = vmatpush1.msra.mxu0 0.0
    %141 = vmatprep.subr.mxu0 0.0
    %142 = vmatpush1.msra.mxu0 0.0
    %143 = vmatprep.subr.mxu0 0.0
    %144 = vmatpush1.msra.mxu0 0.0
    %145 = vmatprep.subr.mxu0 0.0
    %146 = vmatpush1.msra.mxu0 0.0
    %147 = vmatprep.subr.mxu0 0.0
    %148 = vmatpush1.msra.mxu0 0.0
    %149 = vmatprep.subr.mxu0 0.0
    %150 = vmatpush1.msra.mxu0 0.0
    %151 = vmatprep.subr.mxu0 0.0
    %152 = vmatpush1.msra.mxu0 0.0
    %153 = vmatprep.subr.mxu0 0.0
    %154 = vmatpush1.msra.mxu0 0.0
    %155 = vmatprep.subr.mxu0 0.0
    %156 = vmatpush1.msra.mxu0 0.0
    %157 = vmatprep.subr.mxu0 0.0
    %158 = vmatpush1.msra.mxu0 0.0
    %159 = vmatprep.subr.mxu0 0.0
    %160 = vmatpush1.msra.mxu0 0.0
    %161 = vmatprep.subr.mxu0 0.0
    %v162 = vand.u32 %v121, 4294901760
    %163 = vmatpush1.msra.mxu0 %v162
    %164 = vmatprep.subr.mxu0 0.0
    %v165 = vand.u32 %v120, 4294901760
    %166 = vmatpush1.msra.mxu0 %v165
    %167 = vmatprep.subr.mxu0 0.0
    %v168 = vand.u32 %v119, 4294901760
    %169 = vmatpush1.msra.mxu0 %v168
    %170 = vmatprep.subr.mxu0 0.0
    %171 = vmatpush2.msra.mxu0 0.0
    %172 = vmatprep.subr.mxu0 0.0
    %173 = vmatpush2.msra.mxu0 0.0
    %174 = vmatprep.subr.mxu0 0.0
    %175 = vmatpush2.msra.mxu0 0.0
    %176 = vmatprep.subr.mxu0 0.0
    %177 = vmatpush2.msra.mxu0 0.0
    %178 = vmatprep.subr.mxu0 0.0
    %179 = vmatpush2.msra.mxu0 0.0
    %180 = vmatprep.subr.mxu0 0.0
    %181 = vmatpush2.msra.mxu0 0.0
    %182 = vmatprep.subr.mxu0 0.0
    %183 = vmatpush2.msra.mxu0 0.0
    %184 = vmatprep.subr.mxu0 0.0
    %185 = vmatpush2.msra.mxu0 0.0
    %186 = vmatprep.subr.mxu0 0.0
    %187 = vmatpush2.msra.mxu0 0.0
    %188 = vmatprep.subr.mxu0 0.0
    %189 = vmatpush2.msra.mxu0 0.0
    %190 = vmatprep.subr.mxu0 0.0
    %191 = vmatpush2.msra.mxu0 0.0
    %192 = vmatprep.subr.mxu0 0.0
    %193 = vmatpush2.msra.mxu0 0.0
    %194 = vmatprep.subr.mxu0 0.0
    %195 = vmatpush2.msra.mxu0 0.0
    %196 = vmatprep.subr.mxu0 0.0
    %197 = vmatpush2.msra.mxu0 0.0
    %198 = vmatprep.subr.mxu0 0.0
    %199 = vmatpush2.msra.mxu0 0.0
    %200 = vmatprep.subr.mxu0 0.0
    %201 = vmatpush2.msra.mxu0 0.0
    %202 = vmatprep.mubr.f32.mxu0 0.0
    %v203 = vand.u32 %v124, 4294901760
    %v204 = vsub.f32 %v124, %v203
    %v205 = vand.u32 %v204, 4294901760
    %v206 = vsub.f32 %v204, %v205
    %v207 = vand.u32 %v206, 4294901760
    %208 = vmatmul.mubr.f32.gmra.mxu0 %v207
    %v209 = vpop.f32.mrf.mxu0
    %v210 = vadd.f32 0.0, %v209
    %v211 = vpop.f32.mrf.mxu0
    %212 = vmatprep.mubr.f32.mxu0 0.0
    %v213 = vand.u32 %v127, 4294901760
    %v214 = vsub.f32 %v127, %v213
    %v215 = vand.u32 %v214, 4294901760
    %v216 = vsub.f32 %v214, %v215
    %v217 = vand.u32 %v216, 4294901760
    %218 = vmatmul.mubr.f32.gmra.mxu0 %v217
    %v219 = vpop.f32.mrf.mxu0
    %v220 = vadd.f32 0.0, %v219
    %v221 = vpop.f32.mrf.mxu0
    %222 = vmatprep.mubr.f32.mxu0 0.0
    %v223 = vand.u32 %v130, 4294901760
    %v224 = vsub.f32 %v130, %v223
    %v225 = vand.u32 %v224, 4294901760
    %v226 = vsub.f32 %v224, %v225
    %v227 = vand.u32 %v226, 4294901760
    %228 = vmatmul.mubr.f32.gmra.mxu0 %v227
    %v229 = vpop.f32.mrf.mxu0
    %v230 = vadd.f32 0.0, %v229
    %v231 = vpop.f32.mrf.mxu0
    %232 = vmatprep.mubr.f32.mxu0 0.0
    %v233 = vand.u32 %v133, 4294901760
    %v234 = vsub.f32 %v133, %v233
    %v235 = vand.u32 %v234, 4294901760
    %v236 = vsub.f32 %v234, %v235
    %v237 = vand.u32 %v236, 4294901760
    %238 = vmatmul.mubr.f32.gmra.mxu0 %v237
    %v239 = vpop.f32.mrf.mxu0
    %v240 = vadd.f32 0.0, %v239
    %v241 = vpop.f32.mrf.mxu0
    %242 = vdwg.mxu0
    %243 = vmatprep.subr.mxu0 0.0
    %244 = vmatpush1.msra.mxu0 0.0
    %245 = vmatprep.subr.mxu0 0.0
    %246 = vmatpush1.msra.mxu0 0.0
    %247 = vmatprep.subr.mxu0 0.0
    %248 = vmatpush1.msra.mxu0 0.0
    %249 = vmatprep.subr.mxu0 0.0
    %250 = vmatpush1.msra.mxu0 0.0
    %251 = vmatprep.subr.mxu0 0.0
    %252 = vmatpush1.msra.mxu0 0.0
    %253 = vmatprep.subr.mxu0 0.0
    %254 = vmatpush1.msra.mxu0 0.0
    %255 = vmatprep.subr.mxu0 0.0
    %256 = vmatpush1.msra.mxu0 0.0
    %257 = vmatprep.subr.mxu0 0.0
    %258 = vmatpush1.msra.mxu0 0.0
    %259 = vmatprep.subr.mxu0 0.0
    %260 = vmatpush1.msra.mxu0 0.0
    %261 = vmatprep.subr.mxu0 0.0
    %262 = vmatpush1.msra.mxu0 0.0
    %263 = vmatprep.subr.mxu0 0.0
    %264 = vmatpush1.msra.mxu0 0.0
    %265 = vmatprep.subr.mxu0 0.0
    %266 = vmatpush1.msra.mxu0 0.0
    %267 = vmatprep.subr.mxu0 0.0
    %268 = vmatpush1.msra.mxu0 0.0
    %269 = vmatprep.subr.mxu0 0.0
    %v270 = vand.u32 %v121, 4294901760
    %v271 = vsub.f32 %v121, %v270
    %v272 = vand.u32 %v271, 4294901760
    %v273 = vsub.f32 %v271, %v272
    %v274 = vand.u32 %v273, 4294901760
    %275 = vmatpush1.msra.mxu0 %v274
    %276 = vmatprep.subr.mxu0 0.0
    %v277 = vand.u32 %v120, 4294901760
    %v278 = vsub.f32 %v120, %v277
    %v279 = vand.u32 %v278, 4294901760
    %v280 = vsub.f32 %v278, %v279
    %v281 = vand.u32 %v280, 4294901760
    %282 = vmatpush1.msra.mxu0 %v281
    %283 = vmatprep.subr.mxu0 0.0
    %v284 = vand.u32 %v119, 4294901760
    %v285 = vsub.f32 %v119, %v284
    %v286 = vand.u32 %v285, 4294901760
    %v287 = vsub.f32 %v285, %v286
    %v288 = vand.u32 %v287, 4294901760
    %289 = vmatpush1.msra.mxu0 %v288
    %290 = vmatprep.subr.mxu0 0.0
    %291 = vmatpush2.msra.mxu0 0.0
    %292 = vmatprep.subr.mxu0 0.0
    %293 = vmatpush2.msra.mxu0 0.0
    %294 = vmatprep.subr.mxu0 0.0
    %295 = vmatpush2.msra.mxu0 0.0
    %296 = vmatprep.subr.mxu0 0.0
    %297 = vmatpush2.msra.mxu0 0.0
    %298 = vmatprep.subr.mxu0 0.0
    %299 = vmatpush2.msra.mxu0 0.0
    %300 = vmatprep.subr.mxu0 0.0
    %301 = vmatpush2.msra.mxu0 0.0
    %302 = vmatprep.subr.mxu0 0.0
    %303 = vmatpush2.msra.mxu0 0.0
    %304 = vmatprep.subr.mxu0 0.0
    %305 = vmatpush2.msra.mxu0 0.0
    %306 = vmatprep.subr.mxu0 0.0
    %307 = vmatpush2.msra.mxu0 0.0
    %308 = vmatprep.subr.mxu0 0.0
    %309 = vmatpush2.msra.mxu0 0.0
    %310 = vmatprep.subr.mxu0 0.0
    %311 = vmatpush2.msra.mxu0 0.0
    %312 = vmatprep.subr.mxu0 0.0
    %313 = vmatpush2.msra.mxu0 0.0
    %314 = vmatprep.subr.mxu0 0.0
    %315 = vmatpush2.msra.mxu0 0.0
    %316 = vmatprep.subr.mxu0 0.0
    %317 = vmatpush2.msra.mxu0 0.0
    %318 = vmatprep.subr.mxu0 0.0
    %319 = vmatpush2.msra.mxu0 0.0
    %320 = vmatprep.subr.mxu0 0.0
    %321 = vmatpush2.msra.mxu0 0.0
    %322 = vmatprep.mubr.f32.mxu0 0.0
    %v323 = vand.u32 %v124, 4294901760
    %324 = vmatmul.mubr.f32.gmra.mxu0 %v323
    %v325 = vpop.f32.mrf.mxu0
    %v326 = vadd.f32 %v210, %v325
    %v327 = vpop.f32.mrf.mxu0
    %328 = vmatprep.mubr.f32.mxu0 0.0
    %v329 = vand.u32 %v127, 4294901760
    %330 = vmatmul.mubr.f32.gmra.mxu0 %v329
    %v331 = vpop.f32.mrf.mxu0
    %v332 = vadd.f32 %v220, %v331
    %v333 = vpop.f32.mrf.mxu0
    %334 = vmatprep.mubr.f32.mxu0 0.0
    %v335 = vand.u32 %v130, 4294901760
    %336 = vmatmul.mubr.f32.gmra.mxu0 %v335
    %v337 = vpop.f32.mrf.mxu0
    %v338 = vadd.f32 %v230, %v337
    %v339 = vpop.f32.mrf.mxu0
    %340 = vmatprep.mubr.f32.mxu0 0.0
    %v341 = vand.u32 %v133, 4294901760
    %342 = vmatmul.mubr.f32.gmra.mxu0 %v341
    %v343 = vpop.f32.mrf.mxu0
    %v344 = vadd.f32 %v240, %v343
    %v345 = vpop.f32.mrf.mxu0
    %346 = vdwg.mxu0
    %347 = vmatprep.subr.mxu0 0.0
    %348 = vmatpush1.msra.mxu0 0.0
    %349 = vmatprep.subr.mxu0 0.0
    %350 = vmatpush1.msra.mxu0 0.0
    %351 = vmatprep.subr.mxu0 0.0
    %352 = vmatpush1.msra.mxu0 0.0
    %353 = vmatprep.subr.mxu0 0.0
    %354 = vmatpush1.msra.mxu0 0.0
    %355 = vmatprep.subr.mxu0 0.0
    %356 = vmatpush1.msra.mxu0 0.0
    %357 = vmatprep.subr.mxu0 0.0
    %358 = vmatpush1.msra.mxu0 0.0
    %359 = vmatprep.subr.mxu0 0.0
    %360 = vmatpush1.msra.mxu0 0.0
    %361 = vmatprep.subr.mxu0 0.0
    %362 = vmatpush1.msra.mxu0 0.0
    %363 = vmatprep.subr.mxu0 0.0
    %364 = vmatpush1.msra.mxu0 0.0
    %365 = vmatprep.subr.mxu0 0.0
    %366 = vmatpush1.msra.mxu0 0.0
    %367 = vmatprep.subr.mxu0 0.0
    %368 = vmatpush1.msra.mxu0 0.0
    %369 = vmatprep.subr.mxu0 0.0
    %370 = vmatpush1.msra.mxu0 0.0
    %371 = vmatprep.subr.mxu0 0.0
    %372 = vmatpush1.msra.mxu0 0.0
    %373 = vmatprep.subr.mxu0 0.0
    %v374 = vand.u32 %v121, 4294901760
    %v375 = vsub.f32 %v121, %v374
    %376 = vmatpush1.msra.mxu0 %v375
    %377 = vmatprep.subr.mxu0 0.0
    %v378 = vand.u32 %v120, 4294901760
    %v379 = vsub.f32 %v120, %v378
    %380 = vmatpush1.msra.mxu0 %v379
    %381 = vmatprep.subr.mxu0 0.0
    %v382 = vand.u32 %v119, 4294901760
    %v383 = vsub.f32 %v119, %v382
    %384 = vmatpush1.msra.mxu0 %v383
    %385 = vmatprep.subr.mxu0 0.0
    %386 = vmatpush2.msra.mxu0 0.0
    %387 = vmatprep.subr.mxu0 0.0
    %388 = vmatpush2.msra.mxu0 0.0
    %389 = vmatprep.subr.mxu0 0.0
    %390 = vmatpush2.msra.mxu0 0.0
    %391 = vmatprep.subr.mxu0 0.0
    %392 = vmatpush2.msra.mxu0 0.0
    %393 = vmatprep.subr.mxu0 0.0
    %394 = vmatpush2.msra.mxu0 0.0
    %395 = vmatprep.subr.mxu0 0.0
    %396 = vmatpush2.msra.mxu0 0.0
    %397 = vmatprep.subr.mxu0 0.0
    %398 = vmatpush2.msra.mxu0 0.0
    %399 = vmatprep.subr.mxu0 0.0
    %400 = vmatpush2.msra.mxu0 0.0
    %401 = vmatprep.subr.mxu0 0.0
    %402 = vmatpush2.msra.mxu0 0.0
    %403 = vmatprep.subr.mxu0 0.0
    %404 = vmatpush2.msra.mxu0 0.0
    %405 = vmatprep.subr.mxu0 0.0
    %406 = vmatpush2.msra.mxu0 0.0
    %407 = vmatprep.subr.mxu0 0.0
    %408 = vmatpush2.msra.mxu0 0.0
    %409 = vmatprep.subr.mxu0 0.0
    %410 = vmatpush2.msra.mxu0 0.0
    %411 = vmatprep.subr.mxu0 0.0
    %412 = vmatpush2.msra.mxu0 0.0
    %413 = vmatprep.subr.mxu0 0.0
    %414 = vmatpush2.msra.mxu0 0.0
    %415 = vmatprep.subr.mxu0 0.0
    %416 = vmatpush2.msra.mxu0 0.0
    %417 = vmatprep.mubr.f32.mxu0 0.0
    %v418 = vand.u32 %v124, 4294901760
    %v419 = vsub.f32 %v124, %v418
    %420 = vmatmul.mubr.f32.gmra.mxu0 %v419
    %v421 = vpop.f32.mrf.mxu0
    %v422 = vadd.f32 %v326, %v421
    %v423 = vpop.f32.mrf.mxu0
    %424 = vmatprep.mubr.f32.mxu0 0.0
    %v425 = vand.u32 %v127, 4294901760
    %v426 = vsub.f32 %v127, %v425
    %427 = vmatmul.mubr.f32.gmra.mxu0 %v426
    %v428 = vpop.f32.mrf.mxu0
    %v429 = vadd.f32 %v332, %v428
    %v430 = vpop.f32.mrf.mxu0
    %431 = vmatprep.mubr.f32.mxu0 0.0
    %v432 = vand.u32 %v130, 4294901760
    %v433 = vsub.f32 %v130, %v432
    %434 = vmatmul.mubr.f32.gmra.mxu0 %v433
    %v435 = vpop.f32.mrf.mxu0
    %v436 = vadd.f32 %v338, %v435
    %v437 = vpop.f32.mrf.mxu0
    %438 = vmatprep.mubr.f32.mxu0 0.0
    %v439 = vand.u32 %v133, 4294901760
    %v440 = vsub.f32 %v133, %v439
    %441 = vmatmul.mubr.f32.gmra.mxu0 %v440
    %v442 = vpop.f32.mrf.mxu0
    %v443 = vadd.f32 %v344, %v442
    %v444 = vpop.f32.mrf.mxu0
    %445 = vdwg.mxu0
    %446 = vmatprep.subr.mxu0 0.0
    %447 = vmatpush1.msra.mxu0 0.0
    %448 = vmatprep.subr.mxu0 0.0
    %449 = vmatpush1.msra.mxu0 0.0
    %450 = vmatprep.subr.mxu0 0.0
    %451 = vmatpush1.msra.mxu0 0.0
    %452 = vmatprep.subr.mxu0 0.0
    %453 = vmatpush1.msra.mxu0 0.0
    %454 = vmatprep.subr.mxu0 0.0
    %455 = vmatpush1.msra.mxu0 0.0
    %456 = vmatprep.subr.mxu0 0.0
    %457 = vmatpush1.msra.mxu0 0.0
    %458 = vmatprep.subr.mxu0 0.0
    %459 = vmatpush1.msra.mxu0 0.0
    %460 = vmatprep.subr.mxu0 0.0
    %461 = vmatpush1.msra.mxu0 0.0
    %462 = vmatprep.subr.mxu0 0.0
    %463 = vmatpush1.msra.mxu0 0.0
    %464 = vmatprep.subr.mxu0 0.0
    %465 = vmatpush1.msra.mxu0 0.0
    %466 = vmatprep.subr.mxu0 0.0
    %467 = vmatpush1.msra.mxu0 0.0
    %468 = vmatprep.subr.mxu0 0.0
    %469 = vmatpush1.msra.mxu0 0.0
    %470 = vmatprep.subr.mxu0 0.0
    %471 = vmatpush1.msra.mxu0 0.0
    %472 = vmatprep.subr.mxu0 0.0
    %v473 = vand.u32 %v121, 4294901760
    %474 = vmatpush1.msra.mxu0 %v473
    %475 = vmatprep.subr.mxu0 0.0
    %v476 = vand.u32 %v120, 4294901760
    %477 = vmatpush1.msra.mxu0 %v476
    %478 = vmatprep.subr.mxu0 0.0
    %v479 = vand.u32 %v119, 4294901760
    %480 = vmatpush1.msra.mxu0 %v479
    %481 = vmatprep.subr.mxu0 0.0
    %482 = vmatpush2.msra.mxu0 0.0
    %483 = vmatprep.subr.mxu0 0.0
    %484 = vmatpush2.msra.mxu0 0.0
    %485 = vmatprep.subr.mxu0 0.0
    %486 = vmatpush2.msra.mxu0 0.0
    %487 = vmatprep.subr.mxu0 0.0
    %488 = vmatpush2.msra.mxu0 0.0
    %489 = vmatprep.subr.mxu0 0.0
    %490 = vmatpush2.msra.mxu0 0.0
    %491 = vmatprep.subr.mxu0 0.0
    %492 = vmatpush2.msra.mxu0 0.0
    %493 = vmatprep.subr.mxu0 0.0
    %494 = vmatpush2.msra.mxu0 0.0
    %495 = vmatprep.subr.mxu0 0.0
    %496 = vmatpush2.msra.mxu0 0.0
    %497 = vmatprep.subr.mxu0 0.0
    %498 = vmatpush2.msra.mxu0 0.0
    %499 = vmatprep.subr.mxu0 0.0
    %500 = vmatpush2.msra.mxu0 0.0
    %501 = vmatprep.subr.mxu0 0.0
    %502 = vmatpush2.msra.mxu0 0.0
    %503 = vmatprep.subr.mxu0 0.0
    %504 = vmatpush2.msra.mxu0 0.0
    %505 = vmatprep.subr.mxu0 0.0
    %506 = vmatpush2.msra.mxu0 0.0
    %507 = vmatprep.subr.mxu0 0.0
    %508 = vmatpush2.msra.mxu0 0.0
    %509 = vmatprep.subr.mxu0 0.0
    %510 = vmatpush2.msra.mxu0 0.0
    %511 = vmatprep.subr.mxu0 0.0
    %512 = vmatpush2.msra.mxu0 0.0
    %513 = vmatprep.mubr.f32.mxu0 0.0
    %v514 = vand.u32 %v124, 4294901760
    %v515 = vsub.f32 %v124, %v514
    %v516 = vand.u32 %v515, 4294901760
    %517 = vmatmul.mubr.f32.gmra.mxu0 %v516
    %v518 = vpop.f32.mrf.mxu0
    %v519 = vadd.f32 %v422, %v518
    %v520 = vpop.f32.mrf.mxu0
    %521 = vmatprep.mubr.f32.mxu0 0.0
    %v522 = vand.u32 %v127, 4294901760
    %v523 = vsub.f32 %v127, %v522
    %v524 = vand.u32 %v523, 4294901760
    %525 = vmatmul.mubr.f32.gmra.mxu0 %v524
    %v526 = vpop.f32.mrf.mxu0
    %v527 = vadd.f32 %v429, %v526
    %v528 = vpop.f32.mrf.mxu0
    %529 = vmatprep.mubr.f32.mxu0 0.0
    %v530 = vand.u32 %v130, 4294901760
    %v531 = vsub.f32 %v130, %v530
    %v532 = vand.u32 %v531, 4294901760
    %533 = vmatmul.mubr.f32.gmra.mxu0 %v532
    %v534 = vpop.f32.mrf.mxu0
    %v535 = vadd.f32 %v436, %v534
    %v536 = vpop.f32.mrf.mxu0
    %537 = vmatprep.mubr.f32.mxu0 0.0
    %v538 = vand.u32 %v133, 4294901760
    %v539 = vsub.f32 %v133, %v538
    %v540 = vand.u32 %v539, 4294901760
    %541 = vmatmul.mubr.f32.gmra.mxu0 %v540
    %v542 = vpop.f32.mrf.mxu0
    %v543 = vadd.f32 %v443, %v542
    %v544 = vpop.f32.mrf.mxu0
    %545 = vdwg.mxu0
    %546 = vmatprep.subr.mxu0 0.0
    %547 = vmatpush1.msra.mxu0 0.0
    %548 = vmatprep.subr.mxu0 0.0
    %549 = vmatpush1.msra.mxu0 0.0
    %550 = vmatprep.subr.mxu0 0.0
    %551 = vmatpush1.msra.mxu0 0.0
    %552 = vmatprep.subr.mxu0 0.0
    %553 = vmatpush1.msra.mxu0 0.0
    %554 = vmatprep.subr.mxu0 0.0
    %555 = vmatpush1.msra.mxu0 0.0
    %556 = vmatprep.subr.mxu0 0.0
    %557 = vmatpush1.msra.mxu0 0.0
    %558 = vmatprep.subr.mxu0 0.0
    %559 = vmatpush1.msra.mxu0 0.0
    %560 = vmatprep.subr.mxu0 0.0
    %561 = vmatpush1.msra.mxu0 0.0
    %562 = vmatprep.subr.mxu0 0.0
    %563 = vmatpush1.msra.mxu0 0.0
    %564 = vmatprep.subr.mxu0 0.0
    %565 = vmatpush1.msra.mxu0 0.0
    %566 = vmatprep.subr.mxu0 0.0
    %567 = vmatpush1.msra.mxu0 0.0
    %568 = vmatprep.subr.mxu0 0.0
    %569 = vmatpush1.msra.mxu0 0.0
    %570 = vmatprep.subr.mxu0 0.0
    %571 = vmatpush1.msra.mxu0 0.0
    %572 = vmatprep.subr.mxu0 0.0
    %v573 = vand.u32 %v121, 4294901760
    %v574 = vsub.f32 %v121, %v573
    %v575 = vand.u32 %v574, 4294901760
    %576 = vmatpush1.msra.mxu0 %v575
    %577 = vmatprep.subr.mxu0 0.0
    %v578 = vand.u32 %v120, 4294901760
    %v579 = vsub.f32 %v120, %v578
    %v580 = vand.u32 %v579, 4294901760
    %581 = vmatpush1.msra.mxu0 %v580
    %582 = vmatprep.subr.mxu0 0.0
    %v583 = vand.u32 %v119, 4294901760
    %v584 = vsub.f32 %v119, %v583
    %v585 = vand.u32 %v584, 4294901760
    %586 = vmatpush1.msra.mxu0 %v585
    %587 = vmatprep.subr.mxu0 0.0
    %588 = vmatpush2.msra.mxu0 0.0
    %589 = vmatprep.subr.mxu0 0.0
    %590 = vmatpush2.msra.mxu0 0.0
    %591 = vmatprep.subr.mxu0 0.0
    %592 = vmatpush2.msra.mxu0 0.0
    %593 = vmatprep.subr.mxu0 0.0
    %594 = vmatpush2.msra.mxu0 0.0
    %595 = vmatprep.subr.mxu0 0.0
    %596 = vmatpush2.msra.mxu0 0.0
    %597 = vmatprep.subr.mxu0 0.0
    %598 = vmatpush2.msra.mxu0 0.0
    %599 = vmatprep.subr.mxu0 0.0
    %600 = vmatpush2.msra.mxu0 0.0
    %601 = vmatprep.subr.mxu0 0.0
    %602 = vmatpush2.msra.mxu0 0.0
    %603 = vmatprep.subr.mxu0 0.0
    %604 = vmatpush2.msra.mxu0 0.0
    %605 = vmatprep.subr.mxu0 0.0
    %606 = vmatpush2.msra.mxu0 0.0
    %607 = vmatprep.subr.mxu0 0.0
    %608 = vmatpush2.msra.mxu0 0.0
    %609 = vmatprep.subr.mxu0 0.0
    %610 = vmatpush2.msra.mxu0 0.0
    %611 = vmatprep.subr.mxu0 0.0
    %612 = vmatpush2.msra.mxu0 0.0
    %613 = vmatprep.subr.mxu0 0.0
    %614 = vmatpush2.msra.mxu0 0.0
    %615 = vmatprep.subr.mxu0 0.0
    %616 = vmatpush2.msra.mxu0 0.0
    %617 = vmatprep.subr.mxu0 0.0
    %618 = vmatpush2.msra.mxu0 0.0
    %619 = vmatprep.mubr.f32.mxu0 0.0
    %v620 = vand.u32 %v124, 4294901760
    %621 = vmatmul.mubr.f32.gmra.mxu0 %v620
    %v622 = vpop.f32.mrf.mxu0
    %v623 = vadd.f32 %v519, %v622
    %v624 = vpop.f32.mrf.mxu0
    %625 = vmatprep.mubr.f32.mxu0 0.0
    %v626 = vand.u32 %v127, 4294901760
    %627 = vmatmul.mubr.f32.gmra.mxu0 %v626
    %v628 = vpop.f32.mrf.mxu0
    %v629 = vadd.f32 %v527, %v628
    %v630 = vpop.f32.mrf.mxu0
    %631 = vmatprep.mubr.f32.mxu0 0.0
    %v632 = vand.u32 %v130, 4294901760
    %633 = vmatmul.mubr.f32.gmra.mxu0 %v632
    %v634 = vpop.f32.mrf.mxu0
    %v635 = vadd.f32 %v535, %v634
    %v636 = vpop.f32.mrf.mxu0
    %637 = vmatprep.mubr.f32.mxu0 0.0
    %v638 = vand.u32 %v133, 4294901760
    %639 = vmatmul.mubr.f32.gmra.mxu0 %v638
    %v640 = vpop.f32.mrf.mxu0
    %v641 = vadd.f32 %v543, %v640
    %v642 = vpop.f32.mrf.mxu0
    %643 = vdwg.mxu0
    %644 = vmatprep.subr.mxu0 0.0
    %645 = vmatpush1.msra.mxu0 0.0
    %646 = vmatprep.subr.mxu0 0.0
    %647 = vmatpush1.msra.mxu0 0.0
    %648 = vmatprep.subr.mxu0 0.0
    %649 = vmatpush1.msra.mxu0 0.0
    %650 = vmatprep.subr.mxu0 0.0
    %651 = vmatpush1.msra.mxu0 0.0
    %652 = vmatprep.subr.mxu0 0.0
    %653 = vmatpush1.msra.mxu0 0.0
    %654 = vmatprep.subr.mxu0 0.0
    %655 = vmatpush1.msra.mxu0 0.0
    %656 = vmatprep.subr.mxu0 0.0
    %657 = vmatpush1.msra.mxu0 0.0
    %658 = vmatprep.subr.mxu0 0.0
    %659 = vmatpush1.msra.mxu0 0.0
    %660 = vmatprep.subr.mxu0 0.0
    %661 = vmatpush1.msra.mxu0 0.0
    %662 = vmatprep.subr.mxu0 0.0
    %663 = vmatpush1.msra.mxu0 0.0
    %664 = vmatprep.subr.mxu0 0.0
    %665 = vmatpush1.msra.mxu0 0.0
    %666 = vmatprep.subr.mxu0 0.0
    %667 = vmatpush1.msra.mxu0 0.0
    %668 = vmatprep.subr.mxu0 0.0
    %669 = vmatpush1.msra.mxu0 0.0
    %670 = vmatprep.subr.mxu0 0.0
    %v671 = vand.u32 %v121, 4294901760
    %672 = vmatpush1.msra.mxu0 %v671
    %673 = vmatprep.subr.mxu0 0.0
    %v674 = vand.u32 %v120, 4294901760
    %675 = vmatpush1.msra.mxu0 %v674
    %676 = vmatprep.subr.mxu0 0.0
    %v677 = vand.u32 %v119, 4294901760
    %678 = vmatpush1.msra.mxu0 %v677
    %679 = vmatprep.subr.mxu0 0.0
    %680 = vmatpush2.msra.mxu0 0.0
    %681 = vmatprep.subr.mxu0 0.0
    %682 = vmatpush2.msra.mxu0 0.0
    %683 = vmatprep.subr.mxu0 0.0
    %684 = vmatpush2.msra.mxu0 0.0
    %685 = vmatprep.subr.mxu0 0.0
    %686 = vmatpush2.msra.mxu0 0.0
    %687 = vmatprep.subr.mxu0 0.0
    %688 = vmatpush2.msra.mxu0 0.0
    %689 = vmatprep.subr.mxu0 0.0
    %690 = vmatpush2.msra.mxu0 0.0
    %691 = vmatprep.subr.mxu0 0.0
    %692 = vmatpush2.msra.mxu0 0.0
    %693 = vmatprep.subr.mxu0 0.0
    %694 = vmatpush2.msra.mxu0 0.0
    %695 = vmatprep.subr.mxu0 0.0
    %696 = vmatpush2.msra.mxu0 0.0
    %697 = vmatprep.subr.mxu0 0.0
    %698 = vmatpush2.msra.mxu0 0.0
    %699 = vmatprep.subr.mxu0 0.0
    %700 = vmatpush2.msra.mxu0 0.0
    %701 = vmatprep.subr.mxu0 0.0
    %702 = vmatpush2.msra.mxu0 0.0
    %703 = vmatprep.subr.mxu0 0.0
    %704 = vmatpush2.msra.mxu0 0.0
    %705 = vmatprep.subr.mxu0 0.0
    %706 = vmatpush2.msra.mxu0 0.0
    %707 = vmatprep.subr.mxu0 0.0
    %708 = vmatpush2.msra.mxu0 0.0
    %709 = vmatprep.subr.mxu0 0.0
    %710 = vmatpush2.msra.mxu0 0.0
    %711 = vmatprep.mubr.f32.mxu0 0.0
    %v712 = vand.u32 %v124, 4294901760
    %713 = vmatmul.mubr.f32.gmra.mxu0 %v712
    %v714 = vpop.f32.mrf.mxu0
    %v715 = vadd.f32 %v623, %v714
    %v716 = vpop.f32.mrf.mxu0
    %717 = vmatprep.mubr.f32.mxu0 0.0
    %v718 = vand.u32 %v127, 4294901760
    %719 = vmatmul.mubr.f32.gmra.mxu0 %v718
    %v720 = vpop.f32.mrf.mxu0
    %v721 = vadd.f32 %v629, %v720
    %v722 = vpop.f32.mrf.mxu0
    %723 = vmatprep.mubr.f32.mxu0 0.0
    %v724 = vand.u32 %v130, 4294901760
    %725 = vmatmul.mubr.f32.gmra.mxu0 %v724
    %v726 = vpop.f32.mrf.mxu0
    %v727 = vadd.f32 %v635, %v726
    %v728 = vpop.f32.mrf.mxu0
    %729 = vmatprep.mubr.f32.mxu0 0.0
    %v730 = vand.u32 %v133, 4294901760
    %731 = vmatmul.mubr.f32.gmra.mxu0 %v730
    %v732 = vpop.f32.mrf.mxu0
    %v733 = vadd.f32 %v641, %v732
    %v734 = vpop.f32.mrf.mxu0
    %735 = vdwg.mxu0
    %vm736 = vcmask 97280
    %v738 = vsel %vm736, %v15, 0
    %v741 = vsel %vm736, %v16, 0
    %v744 = vsel %vm736, %v17, 0
    %v747 = vsel %vm736, %v18, 0
    %vm749 = vcmask 1043456
    %v751 = vsel %vm749, %v20, 0
    %753 = vmatprep.subr.mxu0 0.0
    %754 = vmatpush1.msra.mxu0 0.0
    %755 = vmatprep.subr.mxu0 0.0
    %756 = vmatpush1.msra.mxu0 0.0
    %757 = vmatprep.subr.mxu0 0.0
    %758 = vmatpush1.msra.mxu0 0.0
    %759 = vmatprep.subr.mxu0 0.0
    %760 = vmatpush1.msra.mxu0 0.0
    %761 = vmatprep.subr.mxu0 0.0
    %762 = vmatpush1.msra.mxu0 0.0
    %763 = vmatprep.subr.mxu0 0.0
    %764 = vmatpush1.msra.mxu0 0.0
    %765 = vmatprep.subr.mxu0 0.0
    %766 = vmatpush1.msra.mxu0 0.0
    %767 = vmatprep.subr.mxu0 0.0
    %768 = vmatpush1.msra.mxu0 0.0
    %769 = vmatprep.subr.mxu0 0.0
    %770 = vmatpush1.msra.mxu0 0.0
    %771 = vmatprep.subr.mxu0 0.0
    %772 = vmatpush1.msra.mxu0 0.0
    %773 = vmatprep.subr.mxu0 0.0
    %774 = vmatpush1.msra.mxu0 0.0
    %775 = vmatprep.subr.mxu0 0.0
    %776 = vmatpush1.msra.mxu0 0.0
    %777 = vmatprep.subr.mxu0 0.0
    %778 = vmatpush1.msra.mxu0 0.0
    %779 = vmatprep.subr.mxu0 0.0
    %780 = vmatpush1.msra.mxu0 0.0
    %781 = vmatprep.subr.mxu0 0.0
    %v782 = vand.u32 %v751, 4294901760
    %783 = vmatpush1.msra.mxu0 %v782
    %784 = vmatprep.subr.mxu0 0.0
    %v785 = vand.u32 %v19, 4294901760
    %786 = vmatpush1.msra.mxu0 %v785
    %787 = vmatprep.subr.mxu0 0.0
    %788 = vmatpush2.msra.mxu0 0.0
    %789 = vmatprep.subr.mxu0 0.0
    %790 = vmatpush2.msra.mxu0 0.0
    %791 = vmatprep.subr.mxu0 0.0
    %792 = vmatpush2.msra.mxu0 0.0
    %793 = vmatprep.subr.mxu0 0.0
    %794 = vmatpush2.msra.mxu0 0.0
    %795 = vmatprep.subr.mxu0 0.0
    %796 = vmatpush2.msra.mxu0 0.0
    %797 = vmatprep.subr.mxu0 0.0
    %798 = vmatpush2.msra.mxu0 0.0
    %799 = vmatprep.subr.mxu0 0.0
    %800 = vmatpush2.msra.mxu0 0.0
    %801 = vmatprep.subr.mxu0 0.0
    %802 = vmatpush2.msra.mxu0 0.0
    %803 = vmatprep.subr.mxu0 0.0
    %804 = vmatpush2.msra.mxu0 0.0
    %805 = vmatprep.subr.mxu0 0.0
    %806 = vmatpush2.msra.mxu0 0.0
    %807 = vmatprep.subr.mxu0 0.0
    %808 = vmatpush2.msra.mxu0 0.0
    %809 = vmatprep.subr.mxu0 0.0
    %810 = vmatpush2.msra.mxu0 0.0
    %811 = vmatprep.subr.mxu0 0.0
    %812 = vmatpush2.msra.mxu0 0.0
    %813 = vmatprep.subr.mxu0 0.0
    %814 = vmatpush2.msra.mxu0 0.0
    %815 = vmatprep.subr.mxu0 0.0
    %816 = vmatpush2.msra.mxu0 0.0
    %817 = vmatprep.subr.mxu0 0.0
    %818 = vmatpush2.msra.mxu0 0.0
    %819 = vmatprep.mubr.f32.mxu0 0.0
    %v820 = vand.u32 %v738, 4294901760
    %v821 = vsub.f32 %v738, %v820
    %v822 = vand.u32 %v821, 4294901760
    %v823 = vsub.f32 %v821, %v822
    %v824 = vand.u32 %v823, 4294901760
    %825 = vmatmul.mubr.f32.gmra.mxu0 %v824
    %v826 = vpop.f32.mrf.mxu0
    %v827 = vadd.f32 %v715, %v826
    %v828 = vpop.f32.mrf.mxu0
    %829 = vmatprep.mubr.f32.mxu0 0.0
    %v830 = vand.u32 %v741, 4294901760
    %v831 = vsub.f32 %v741, %v830
    %v832 = vand.u32 %v831, 4294901760
    %v833 = vsub.f32 %v831, %v832
    %v834 = vand.u32 %v833, 4294901760
    %835 = vmatmul.mubr.f32.gmra.mxu0 %v834
    %v836 = vpop.f32.mrf.mxu0
    %v837 = vadd.f32 %v721, %v836
    %v838 = vpop.f32.mrf.mxu0
    %839 = vmatprep.mubr.f32.mxu0 0.0
    %v840 = vand.u32 %v744, 4294901760
    %v841 = vsub.f32 %v744, %v840
    %v842 = vand.u32 %v841, 4294901760
    %v843 = vsub.f32 %v841, %v842
    %v844 = vand.u32 %v843, 4294901760
    %845 = vmatmul.mubr.f32.gmra.mxu0 %v844
    %v846 = vpop.f32.mrf.mxu0
    %v847 = vadd.f32 %v727, %v846
    %v848 = vpop.f32.mrf.mxu0
    %849 = vmatprep.mubr.f32.mxu0 0.0
    %v850 = vand.u32 %v747, 4294901760
    %v851 = vsub.f32 %v747, %v850
    %v852 = vand.u32 %v851, 4294901760
    %v853 = vsub.f32 %v851, %v852
    %v854 = vand.u32 %v853, 4294901760
    %855 = vmatmul.mubr.f32.gmra.mxu0 %v854
    %v856 = vpop.f32.mrf.mxu0
    %v857 = vadd.f32 %v733, %v856
    %v858 = vpop.f32.mrf.mxu0
    %859 = vdwg.mxu0
    %860 = vmatprep.subr.mxu0 0.0
    %861 = vmatpush1.msra.mxu0 0.0
    %862 = vmatprep.subr.mxu0 0.0
    %863 = vmatpush1.msra.mxu0 0.0
    %864 = vmatprep.subr.mxu0 0.0
    %865 = vmatpush1.msra.mxu0 0.0
    %866 = vmatprep.subr.mxu0 0.0
    %867 = vmatpush1.msra.mxu0 0.0
    %868 = vmatprep.subr.mxu0 0.0
    %869 = vmatpush1.msra.mxu0 0.0
    %870 = vmatprep.subr.mxu0 0.0
    %871 = vmatpush1.msra.mxu0 0.0
    %872 = vmatprep.subr.mxu0 0.0
    %873 = vmatpush1.msra.mxu0 0.0
    %874 = vmatprep.subr.mxu0 0.0
    %875 = vmatpush1.msra.mxu0 0.0
    %876 = vmatprep.subr.mxu0 0.0
    %877 = vmatpush1.msra.mxu0 0.0
    %878 = vmatprep.subr.mxu0 0.0
    %879 = vmatpush1.msra.mxu0 0.0
    %880 = vmatprep.subr.mxu0 0.0
    %881 = vmatpush1.msra.mxu0 0.0
    %882 = vmatprep.subr.mxu0 0.0
    %883 = vmatpush1.msra.mxu0 0.0
    %884 = vmatprep.subr.mxu0 0.0
    %885 = vmatpush1.msra.mxu0 0.0
    %886 = vmatprep.subr.mxu0 0.0
    %887 = vmatpush1.msra.mxu0 0.0
    %888 = vmatprep.subr.mxu0 0.0
    %v889 = vand.u32 %v751, 4294901760
    %v890 = vsub.f32 %v751, %v889
    %v891 = vand.u32 %v890, 4294901760
    %v892 = vsub.f32 %v890, %v891
    %v893 = vand.u32 %v892, 4294901760
    %894 = vmatpush1.msra.mxu0 %v893
    %895 = vmatprep.subr.mxu0 0.0
    %v896 = vand.u32 %v19, 4294901760
    %v897 = vsub.f32 %v19, %v896
    %v898 = vand.u32 %v897, 4294901760
    %v899 = vsub.f32 %v897, %v898
    %v900 = vand.u32 %v899, 4294901760
    %901 = vmatpush1.msra.mxu0 %v900
    %902 = vmatprep.subr.mxu0 0.0
    %903 = vmatpush2.msra.mxu0 0.0
    %904 = vmatprep.subr.mxu0 0.0
    %905 = vmatpush2.msra.mxu0 0.0
    %906 = vmatprep.subr.mxu0 0.0
    %907 = vmatpush2.msra.mxu0 0.0
    %908 = vmatprep.subr.mxu0 0.0
    %909 = vmatpush2.msra.mxu0 0.0
    %910 = vmatprep.subr.mxu0 0.0
    %911 = vmatpush2.msra.mxu0 0.0
    %912 = vmatprep.subr.mxu0 0.0
    %913 = vmatpush2.msra.mxu0 0.0
    %914 = vmatprep.subr.mxu0 0.0
    %915 = vmatpush2.msra.mxu0 0.0
    %916 = vmatprep.subr.mxu0 0.0
    %917 = vmatpush2.msra.mxu0 0.0
    %918 = vmatprep.subr.mxu0 0.0
    %919 = vmatpush2.msra.mxu0 0.0
    %920 = vmatprep.subr.mxu0 0.0
    %921 = vmatpush2.msra.mxu0 0.0
    %922 = vmatprep.subr.mxu0 0.0
    %923 = vmatpush2.msra.mxu0 0.0
    %924 = vmatprep.subr.mxu0 0.0
    %925 = vmatpush2.msra.mxu0 0.0
    %926 = vmatprep.subr.mxu0 0.0
    %927 = vmatpush2.msra.mxu0 0.0
    %928 = vmatprep.subr.mxu0 0.0
    %929 = vmatpush2.msra.mxu0 0.0
    %930 = vmatprep.subr.mxu0 0.0
    %931 = vmatpush2.msra.mxu0 0.0
    %932 = vmatprep.subr.mxu0 0.0
    %933 = vmatpush2.msra.mxu0 0.0
    %934 = vmatprep.mubr.f32.mxu0 0.0
    %v935 = vand.u32 %v738, 4294901760
    %936 = vmatmul.mubr.f32.gmra.mxu0 %v935
    %v937 = vpop.f32.mrf.mxu0
    %v938 = vadd.f32 %v827, %v937
    %v939 = vpop.f32.mrf.mxu0
    %940 = vmatprep.mubr.f32.mxu0 0.0
    %v941 = vand.u32 %v741, 4294901760
    %942 = vmatmul.mubr.f32.gmra.mxu0 %v941
    %v943 = vpop.f32.mrf.mxu0
    %v944 = vadd.f32 %v837, %v943
    %v945 = vpop.f32.mrf.mxu0
    %946 = vmatprep.mubr.f32.mxu0 0.0
    %v947 = vand.u32 %v744, 4294901760
    %948 = vmatmul.mubr.f32.gmra.mxu0 %v947
    %v949 = vpop.f32.mrf.mxu0
    %v950 = vadd.f32 %v847, %v949
    %v951 = vpop.f32.mrf.mxu0
    %952 = vmatprep.mubr.f32.mxu0 0.0
    %v953 = vand.u32 %v747, 4294901760
    %954 = vmatmul.mubr.f32.gmra.mxu0 %v953
    %v955 = vpop.f32.mrf.mxu0
    %v956 = vadd.f32 %v857, %v955
    %v957 = vpop.f32.mrf.mxu0
    %958 = vdwg.mxu0
    %959 = vmatprep.subr.mxu0 0.0
    %960 = vmatpush1.msra.mxu0 0.0
    %961 = vmatprep.subr.mxu0 0.0
    %962 = vmatpush1.msra.mxu0 0.0
    %963 = vmatprep.subr.mxu0 0.0
    %964 = vmatpush1.msra.mxu0 0.0
    %965 = vmatprep.subr.mxu0 0.0
    %966 = vmatpush1.msra.mxu0 0.0
    %967 = vmatprep.subr.mxu0 0.0
    %968 = vmatpush1.msra.mxu0 0.0
    %969 = vmatprep.subr.mxu0 0.0
    %970 = vmatpush1.msra.mxu0 0.0
    %971 = vmatprep.subr.mxu0 0.0
    %972 = vmatpush1.msra.mxu0 0.0
    %973 = vmatprep.subr.mxu0 0.0
    %974 = vmatpush1.msra.mxu0 0.0
    %975 = vmatprep.subr.mxu0 0.0
    %976 = vmatpush1.msra.mxu0 0.0
    %977 = vmatprep.subr.mxu0 0.0
    %978 = vmatpush1.msra.mxu0 0.0
    %979 = vmatprep.subr.mxu0 0.0
    %980 = vmatpush1.msra.mxu0 0.0
    %981 = vmatprep.subr.mxu0 0.0
    %982 = vmatpush1.msra.mxu0 0.0
    %983 = vmatprep.subr.mxu0 0.0
    %984 = vmatpush1.msra.mxu0 0.0
    %985 = vmatprep.subr.mxu0 0.0
    %986 = vmatpush1.msra.mxu0 0.0
    %987 = vmatprep.subr.mxu0 0.0
    %v988 = vand.u32 %v751, 4294901760
    %v989 = vsub.f32 %v751, %v988
    %990 = vmatpush1.msra.mxu0 %v989
    %991 = vmatprep.subr.mxu0 0.0
    %v992 = vand.u32 %v19, 4294901760
    %v993 = vsub.f32 %v19, %v992
    %994 = vmatpush1.msra.mxu0 %v993
    %995 = vmatprep.subr.mxu0 0.0
    %996 = vmatpush2.msra.mxu0 0.0
    %997 = vmatprep.subr.mxu0 0.0
    %998 = vmatpush2.msra.mxu0 0.0
    %999 = vmatprep.subr.mxu0 0.0
    %1000 = vmatpush2.msra.mxu0 0.0
    %1001 = vmatprep.subr.mxu0 0.0
    %1002 = vmatpush2.msra.mxu0 0.0
    %1003 = vmatprep.subr.mxu0 0.0
    %1004 = vmatpush2.msra.mxu0 0.0
    %1005 = vmatprep.subr.mxu0 0.0
    %1006 = vmatpush2.msra.mxu0 0.0
    %1007 = vmatprep.subr.mxu0 0.0
    %1008 = vmatpush2.msra.mxu0 0.0
    %1009 = vmatprep.subr.mxu0 0.0
    %1010 = vmatpush2.msra.mxu0 0.0
    %1011 = vmatprep.subr.mxu0 0.0
    %1012 = vmatpush2.msra.mxu0 0.0
    %1013 = vmatprep.subr.mxu0 0.0
    %1014 = vmatpush2.msra.mxu0 0.0
    %1015 = vmatprep.subr.mxu0 0.0
    %1016 = vmatpush2.msra.mxu0 0.0
    %1017 = vmatprep.subr.mxu0 0.0
    %1018 = vmatpush2.msra.mxu0 0.0
    %1019 = vmatprep.subr.mxu0 0.0
    %1020 = vmatpush2.msra.mxu0 0.0
    %1021 = vmatprep.subr.mxu0 0.0
    %1022 = vmatpush2.msra.mxu0 0.0
    %1023 = vmatprep.subr.mxu0 0.0
    %1024 = vmatpush2.msra.mxu0 0.0
    %1025 = vmatprep.subr.mxu0 0.0
    %1026 = vmatpush2.msra.mxu0 0.0
    %1027 = vmatprep.mubr.f32.mxu0 0.0
    %v1028 = vand.u32 %v738, 4294901760
    %v1029 = vsub.f32 %v738, %v1028
    %1030 = vmatmul.mubr.f32.gmra.mxu0 %v1029
    %v1031 = vpop.f32.mrf.mxu0
    %v1032 = vadd.f32 %v938, %v1031
    %v1033 = vpop.f32.mrf.mxu0
    %1034 = vmatprep.mubr.f32.mxu0 0.0
    %v1035 = vand.u32 %v741, 4294901760
    %v1036 = vsub.f32 %v741, %v1035
    %1037 = vmatmul.mubr.f32.gmra.mxu0 %v1036
    %v1038 = vpop.f32.mrf.mxu0
    %v1039 = vadd.f32 %v944, %v1038
    %v1040 = vpop.f32.mrf.mxu0
    %1041 = vmatprep.mubr.f32.mxu0 0.0
    %v1042 = vand.u32 %v744, 4294901760
    %v1043 = vsub.f32 %v744, %v1042
    %1044 = vmatmul.mubr.f32.gmra.mxu0 %v1043
    %v1045 = vpop.f32.mrf.mxu0
    %v1046 = vadd.f32 %v950, %v1045
    %v1047 = vpop.f32.mrf.mxu0
    %1048 = vmatprep.mubr.f32.mxu0 0.0
    %v1049 = vand.u32 %v747, 4294901760
    %v1050 = vsub.f32 %v747, %v1049
    %1051 = vmatmul.mubr.f32.gmra.mxu0 %v1050
    %v1052 = vpop.f32.mrf.mxu0
    %v1053 = vadd.f32 %v956, %v1052
    %v1054 = vpop.f32.mrf.mxu0
    %1055 = vdwg.mxu0
    %1056 = vmatprep.subr.mxu0 0.0
    %1057 = vmatpush1.msra.mxu0 0.0
    %1058 = vmatprep.subr.mxu0 0.0
    %1059 = vmatpush1.msra.mxu0 0.0
    %1060 = vmatprep.subr.mxu0 0.0
    %1061 = vmatpush1.msra.mxu0 0.0
    %1062 = vmatprep.subr.mxu0 0.0
    %1063 = vmatpush1.msra.mxu0 0.0
    %1064 = vmatprep.subr.mxu0 0.0
    %1065 = vmatpush1.msra.mxu0 0.0
    %1066 = vmatprep.subr.mxu0 0.0
    %1067 = vmatpush1.msra.mxu0 0.0
    %1068 = vmatprep.subr.mxu0 0.0
    %1069 = vmatpush1.msra.mxu0 0.0
    %1070 = vmatprep.subr.mxu0 0.0
    %1071 = vmatpush1.msra.mxu0 0.0
    %1072 = vmatprep.subr.mxu0 0.0
    %1073 = vmatpush1.msra.mxu0 0.0
    %1074 = vmatprep.subr.mxu0 0.0
    %1075 = vmatpush1.msra.mxu0 0.0
    %1076 = vmatprep.subr.mxu0 0.0
    %1077 = vmatpush1.msra.mxu0 0.0
    %1078 = vmatprep.subr.mxu0 0.0
    %1079 = vmatpush1.msra.mxu0 0.0
    %1080 = vmatprep.subr.mxu0 0.0
    %1081 = vmatpush1.msra.mxu0 0.0
    %1082 = vmatprep.subr.mxu0 0.0
    %1083 = vmatpush1.msra.mxu0 0.0
    %1084 = vmatprep.subr.mxu0 0.0
    %v1085 = vand.u32 %v751, 4294901760
    %1086 = vmatpush1.msra.mxu0 %v1085
    %1087 = vmatprep.subr.mxu0 0.0
    %v1088 = vand.u32 %v19, 4294901760
    %1089 = vmatpush1.msra.mxu0 %v1088
    %1090 = vmatprep.subr.mxu0 0.0
    %1091 = vmatpush2.msra.mxu0 0.0
    %1092 = vmatprep.subr.mxu0 0.0
    %1093 = vmatpush2.msra.mxu0 0.0
    %1094 = vmatprep.subr.mxu0 0.0
    %1095 = vmatpush2.msra.mxu0 0.0
    %1096 = vmatprep.subr.mxu0 0.0
    %1097 = vmatpush2.msra.mxu0 0.0
    %1098 = vmatprep.subr.mxu0 0.0
    %1099 = vmatpush2.msra.mxu0 0.0
    %1100 = vmatprep.subr.mxu0 0.0
    %1101 = vmatpush2.msra.mxu0 0.0
    %1102 = vmatprep.subr.mxu0 0.0
    %1103 = vmatpush2.msra.mxu0 0.0
    %1104 = vmatprep.subr.mxu0 0.0
    %1105 = vmatpush2.msra.mxu0 0.0
    %1106 = vmatprep.subr.mxu0 0.0
    %1107 = vmatpush2.msra.mxu0 0.0
    %1108 = vmatprep.subr.mxu0 0.0
    %1109 = vmatpush2.msra.mxu0 0.0
    %1110 = vmatprep.subr.mxu0 0.0
    %1111 = vmatpush2.msra.mxu0 0.0
    %1112 = vmatprep.subr.mxu0 0.0
    %1113 = vmatpush2.msra.mxu0 0.0
    %1114 = vmatprep.subr.mxu0 0.0
    %1115 = vmatpush2.msra.mxu0 0.0
    %1116 = vmatprep.subr.mxu0 0.0
    %1117 = vmatpush2.msra.mxu0 0.0
    %1118 = vmatprep.subr.mxu0 0.0
    %1119 = vmatpush2.msra.mxu0 0.0
    %1120 = vmatprep.subr.mxu0 0.0
    %1121 = vmatpush2.msra.mxu0 0.0
    %1122 = vmatprep.mubr.f32.mxu0 0.0
    %v1123 = vand.u32 %v738, 4294901760
    %v1124 = vsub.f32 %v738, %v1123
    %v1125 = vand.u32 %v1124, 4294901760
    %1126 = vmatmul.mubr.f32.gmra.mxu0 %v1125
    %v1127 = vpop.f32.mrf.mxu0
    %v1128 = vadd.f32 %v1032, %v1127
    %v1129 = vpop.f32.mrf.mxu0
    %1130 = vmatprep.mubr.f32.mxu0 0.0
    %v1131 = vand.u32 %v741, 4294901760
    %v1132 = vsub.f32 %v741, %v1131
    %v1133 = vand.u32 %v1132, 4294901760
    %1134 = vmatmul.mubr.f32.gmra.mxu0 %v1133
    %v1135 = vpop.f32.mrf.mxu0
    %v1136 = vadd.f32 %v1039, %v1135
    %v1137 = vpop.f32.mrf.mxu0
    %1138 = vmatprep.mubr.f32.mxu0 0.0
    %v1139 = vand.u32 %v744, 4294901760
    %v1140 = vsub.f32 %v744, %v1139
    %v1141 = vand.u32 %v1140, 4294901760
    %1142 = vmatmul.mubr.f32.gmra.mxu0 %v1141
    %v1143 = vpop.f32.mrf.mxu0
    %v1144 = vadd.f32 %v1046, %v1143
    %v1145 = vpop.f32.mrf.mxu0
    %1146 = vmatprep.mubr.f32.mxu0 0.0
    %v1147 = vand.u32 %v747, 4294901760
    %v1148 = vsub.f32 %v747, %v1147
    %v1149 = vand.u32 %v1148, 4294901760
    %1150 = vmatmul.mubr.f32.gmra.mxu0 %v1149
    %v1151 = vpop.f32.mrf.mxu0
    %v1152 = vadd.f32 %v1053, %v1151
    %v1153 = vpop.f32.mrf.mxu0
    %1154 = vdwg.mxu0
    %1155 = vmatprep.subr.mxu0 0.0
    %1156 = vmatpush1.msra.mxu0 0.0
    %1157 = vmatprep.subr.mxu0 0.0
    %1158 = vmatpush1.msra.mxu0 0.0
    %1159 = vmatprep.subr.mxu0 0.0
    %1160 = vmatpush1.msra.mxu0 0.0
    %1161 = vmatprep.subr.mxu0 0.0
    %1162 = vmatpush1.msra.mxu0 0.0
    %1163 = vmatprep.subr.mxu0 0.0
    %1164 = vmatpush1.msra.mxu0 0.0
    %1165 = vmatprep.subr.mxu0 0.0
    %1166 = vmatpush1.msra.mxu0 0.0
    %1167 = vmatprep.subr.mxu0 0.0
    %1168 = vmatpush1.msra.mxu0 0.0
    %1169 = vmatprep.subr.mxu0 0.0
    %1170 = vmatpush1.msra.mxu0 0.0
    %1171 = vmatprep.subr.mxu0 0.0
    %1172 = vmatpush1.msra.mxu0 0.0
    %1173 = vmatprep.subr.mxu0 0.0
    %1174 = vmatpush1.msra.mxu0 0.0
    %1175 = vmatprep.subr.mxu0 0.0
    %1176 = vmatpush1.msra.mxu0 0.0
    %1177 = vmatprep.subr.mxu0 0.0
    %1178 = vmatpush1.msra.mxu0 0.0
    %1179 = vmatprep.subr.mxu0 0.0
    %1180 = vmatpush1.msra.mxu0 0.0
    %1181 = vmatprep.subr.mxu0 0.0
    %1182 = vmatpush1.msra.mxu0 0.0
    %1183 = vmatprep.subr.mxu0 0.0
    %v1184 = vand.u32 %v751, 4294901760
    %v1185 = vsub.f32 %v751, %v1184
    %v1186 = vand.u32 %v1185, 4294901760
    %1187 = vmatpush1.msra.mxu0 %v1186
    %1188 = vmatprep.subr.mxu0 0.0
    %v1189 = vand.u32 %v19, 4294901760
    %v1190 = vsub.f32 %v19, %v1189
    %v1191 = vand.u32 %v1190, 4294901760
    %1192 = vmatpush1.msra.mxu0 %v1191
    %1193 = vmatprep.subr.mxu0 0.0
    %1194 = vmatpush2.msra.mxu0 0.0
    %1195 = vmatprep.subr.mxu0 0.0
    %1196 = vmatpush2.msra.mxu0 0.0
    %1197 = vmatprep.subr.mxu0 0.0
    %1198 = vmatpush2.msra.mxu0 0.0
    %1199 = vmatprep.subr.mxu0 0.0
    %1200 = vmatpush2.msra.mxu0 0.0
    %1201 = vmatprep.subr.mxu0 0.0
    %1202 = vmatpush2.msra.mxu0 0.0
    %1203 = vmatprep.subr.mxu0 0.0
    %1204 = vmatpush2.msra.mxu0 0.0
    %1205 = vmatprep.subr.mxu0 0.0
    %1206 = vmatpush2.msra.mxu0 0.0
    %1207 = vmatprep.subr.mxu0 0.0
    %1208 = vmatpush2.msra.mxu0 0.0
    %1209 = vmatprep.subr.mxu0 0.0
    %1210 = vmatpush2.msra.mxu0 0.0
    %1211 = vmatprep.subr.mxu0 0.0
    %1212 = vmatpush2.msra.mxu0 0.0
    %1213 = vmatprep.subr.mxu0 0.0
    %1214 = vmatpush2.msra.mxu0 0.0
    %1215 = vmatprep.subr.mxu0 0.0
    %1216 = vmatpush2.msra.mxu0 0.0
    %1217 = vmatprep.subr.mxu0 0.0
    %1218 = vmatpush2.msra.mxu0 0.0
    %1219 = vmatprep.subr.mxu0 0.0
    %1220 = vmatpush2.msra.mxu0 0.0
    %1221 = vmatprep.subr.mxu0 0.0
    %1222 = vmatpush2.msra.mxu0 0.0
    %1223 = vmatprep.subr.mxu0 0.0
    %1224 = vmatpush2.msra.mxu0 0.0
    %1225 = vmatprep.mubr.f32.mxu0 0.0
    %v1226 = vand.u32 %v738, 4294901760
    %1227 = vmatmul.mubr.f32.gmra.mxu0 %v1226
    %v1228 = vpop.f32.mrf.mxu0
    %v1229 = vadd.f32 %v1128, %v1228
    %v1230 = vpop.f32.mrf.mxu0
    %1231 = vmatprep.mubr.f32.mxu0 0.0
    %v1232 = vand.u32 %v741, 4294901760
    %1233 = vmatmul.mubr.f32.gmra.mxu0 %v1232
    %v1234 = vpop.f32.mrf.mxu0
    %v1235 = vadd.f32 %v1136, %v1234
    %v1236 = vpop.f32.mrf.mxu0
    %1237 = vmatprep.mubr.f32.mxu0 0.0
    %v1238 = vand.u32 %v744, 4294901760
    %1239 = vmatmul.mubr.f32.gmra.mxu0 %v1238
    %v1240 = vpop.f32.mrf.mxu0
    %v1241 = vadd.f32 %v1144, %v1240
    %v1242 = vpop.f32.mrf.mxu0
    %1243 = vmatprep.mubr.f32.mxu0 0.0
    %v1244 = vand.u32 %v747, 4294901760
    %1245 = vmatmul.mubr.f32.gmra.mxu0 %v1244
    %v1246 = vpop.f32.mrf.mxu0
    %v1247 = vadd.f32 %v1152, %v1246
    %v1248 = vpop.f32.mrf.mxu0
    %1249 = vdwg.mxu0
    %1250 = vmatprep.subr.mxu0 0.0
    %1251 = vmatpush1.msra.mxu0 0.0
    %1252 = vmatprep.subr.mxu0 0.0
    %1253 = vmatpush1.msra.mxu0 0.0
    %1254 = vmatprep.subr.mxu0 0.0
    %1255 = vmatpush1.msra.mxu0 0.0
    %1256 = vmatprep.subr.mxu0 0.0
    %1257 = vmatpush1.msra.mxu0 0.0
    %1258 = vmatprep.subr.mxu0 0.0
    %1259 = vmatpush1.msra.mxu0 0.0
    %1260 = vmatprep.subr.mxu0 0.0
    %1261 = vmatpush1.msra.mxu0 0.0
    %1262 = vmatprep.subr.mxu0 0.0
    %1263 = vmatpush1.msra.mxu0 0.0
    %1264 = vmatprep.subr.mxu0 0.0
    %1265 = vmatpush1.msra.mxu0 0.0
    %1266 = vmatprep.subr.mxu0 0.0
    %1267 = vmatpush1.msra.mxu0 0.0
    %1268 = vmatprep.subr.mxu0 0.0
    %1269 = vmatpush1.msra.mxu0 0.0
    %1270 = vmatprep.subr.mxu0 0.0
    %1271 = vmatpush1.msra.mxu0 0.0
    %1272 = vmatprep.subr.mxu0 0.0
    %1273 = vmatpush1.msra.mxu0 0.0
    %1274 = vmatprep.subr.mxu0 0.0
    %1275 = vmatpush1.msra.mxu0 0.0
    %1276 = vmatprep.subr.mxu0 0.0
    %1277 = vmatpush1.msra.mxu0 0.0
    %1278 = vmatprep.subr.mxu0 0.0
    %v1279 = vand.u32 %v751, 4294901760
    %1280 = vmatpush1.msra.mxu0 %v1279
    %1281 = vmatprep.subr.mxu0 0.0
    %v1282 = vand.u32 %v19, 4294901760
    %1283 = vmatpush1.msra.mxu0 %v1282
    %1284 = vmatprep.subr.mxu0 0.0
    %1285 = vmatpush2.msra.mxu0 0.0
    %1286 = vmatprep.subr.mxu0 0.0
    %1287 = vmatpush2.msra.mxu0 0.0
    %1288 = vmatprep.subr.mxu0 0.0
    %1289 = vmatpush2.msra.mxu0 0.0
    %1290 = vmatprep.subr.mxu0 0.0
    %1291 = vmatpush2.msra.mxu0 0.0
    %1292 = vmatprep.subr.mxu0 0.0
    %1293 = vmatpush2.msra.mxu0 0.0
    %1294 = vmatprep.subr.mxu0 0.0
    %1295 = vmatpush2.msra.mxu0 0.0
    %1296 = vmatprep.subr.mxu0 0.0
    %1297 = vmatpush2.msra.mxu0 0.0
    %1298 = vmatprep.subr.mxu0 0.0
    %1299 = vmatpush2.msra.mxu0 0.0
    %1300 = vmatprep.subr.mxu0 0.0
    %1301 = vmatpush2.msra.mxu0 0.0
    %1302 = vmatprep.subr.mxu0 0.0
    %1303 = vmatpush2.msra.mxu0 0.0
    %1304 = vmatprep.subr.mxu0 0.0
    %1305 = vmatpush2.msra.mxu0 0.0
    %1306 = vmatprep.subr.mxu0 0.0
    %1307 = vmatpush2.msra.mxu0 0.0
    %1308 = vmatprep.subr.mxu0 0.0
    %1309 = vmatpush2.msra.mxu0 0.0
    %1310 = vmatprep.subr.mxu0 0.0
    %1311 = vmatpush2.msra.mxu0 0.0
    %1312 = vmatprep.subr.mxu0 0.0
    %1313 = vmatpush2.msra.mxu0 0.0
    %1314 = vmatprep.subr.mxu0 0.0
    %1315 = vmatpush2.msra.mxu0 0.0
    %1316 = vmatprep.mubr.f32.mxu0 0.0
    %v1317 = vand.u32 %v738, 4294901760
    %1318 = vmatmul.mubr.f32.gmra.mxu0 %v1317
    %v1319 = vpop.f32.mrf.mxu0
    %v1320 = vadd.f32 %v1229, %v1319
    %v1321 = vpop.f32.mrf.mxu0
    %1322 = vmatprep.mubr.f32.mxu0 0.0
    %v1323 = vand.u32 %v741, 4294901760
    %1324 = vmatmul.mubr.f32.gmra.mxu0 %v1323
    %v1325 = vpop.f32.mrf.mxu0
    %v1326 = vadd.f32 %v1235, %v1325
    %v1327 = vpop.f32.mrf.mxu0
    %1328 = vmatprep.mubr.f32.mxu0 0.0
    %v1329 = vand.u32 %v744, 4294901760
    %1330 = vmatmul.mubr.f32.gmra.mxu0 %v1329
    %v1331 = vpop.f32.mrf.mxu0
    %v1332 = vadd.f32 %v1241, %v1331
    %v1333 = vpop.f32.mrf.mxu0
    %1334 = vmatprep.mubr.f32.mxu0 0.0
    %v1335 = vand.u32 %v747, 4294901760
    %1336 = vmatmul.mubr.f32.gmra.mxu0 %v1335
    %v1337 = vpop.f32.mrf.mxu0
    %v1338 = vadd.f32 %v1247, %v1337
    %v1339 = vpop.f32.mrf.mxu0
    %1340 = vdwg.mxu0
    %1341 = vst [vmem:[#allocation2] sm:$0xff] %v1320
    %1342 = vst [vmem:[#allocation2 + $0x8] sm:$0xff] %v1326
    %1343 = vst [vmem:[#allocation2 + $0x10] sm:$0xff] %v1332
    %1344 = vst [vmem:[#allocation2 + $0x18] sm:$0xff] %v1338
    // Predicated region
    $region14: #{tpu_custom_call.1} parent=1 // pred_check
      _
    $region15: #{tpu_custom_call.1} parent=1 // pred_check_branch
      %1346 = sbr.rel (0) target = $region17
    $region16: #{tpu_custom_call.1} parent=1 // pred_region
      %s1348 = ssub.s32 512, 512
      %1349 = vsyncadd [#allocation3], %s1348
      %s1350 = sshll.u32 [#allocation2], 4
      %s1351 = int_to_ptr.vmem [resolvable:$true] %s1350
      %1356 = dma.vmem_to_hbm [thread:$0]  %s1351, 512, %s3, [#allocation3], 128, 128, 8
    $region17: #{tpu_custom_call.1} parent=1 // pred_fallthru
      _
    // Predicated region
    $region18: #{tpu_custom_call.1} parent=1 // pred_check
      _
    $region19: #{tpu_custom_call.1} parent=1 // pred_check_branch
      %1358 = sbr.rel (0) target = $region21
    $region20: #{tpu_custom_call.1} parent=1 // pred_region
      %1359 = dma.done [#allocation3], 512
    $region21: #{tpu_custom_call.1} parent=1 // pred_fallthru
      _
    %1360 = vsyncpa [#allocation3], 1

</llo_original>
